<compile_context>
chip_gen: v7x
topology: tpu7x:2x2x1
jax: 0.10.0
libtpu: 0.0.40
codegen_flags: <defaults>
</compile_context>

<pallas_src>
import functools

import jax
import jax.numpy as jnp
from jax.experimental import pallas as pl
from jax.experimental.pallas import tpu as pltpu


def _global_avg_pool_kernel(x_ref, o_ref, acc_ref, *, inv_n):
    """x_ref:   (TM, TK) tile of the (rows, H*W) view.
       acc_ref: (TM, 1) f32 running partial sums across the K (reduction) axis.
       o_ref:   (TM, 1) output, written once on the last K step."""
    k = pl.program_id(1)

    @pl.when(k == 0)
    def _():
        acc_ref[...] = jnp.zeros_like(acc_ref)

    # Accumulate in f32 regardless of input dtype; only the per-row partial
    # sums live as f32 (bf16 inputs stay packed until the reduce).
    acc_ref[...] += jnp.sum(
        x_ref[...].astype(jnp.float32), axis=-1, keepdims=True
    )

    @pl.when(k == pl.num_programs(1) - 1)
    def _():
        o_ref[...] = (acc_ref[...] * inv_n).astype(o_ref.dtype)


def _pick_tile(dim, base, max_tile):
    """Largest tile t <= max_tile with t % base == 0 and dim % t == 0.
    Falls back to the full dim (always a legal block extent) otherwise."""
    if dim <= max_tile:
        return dim
    if dim % base != 0:
        return dim
    t = (min(max_tile, dim) // base) * base
    while t > 0 and dim % t != 0:
        t -= base
    return t if t > 0 else dim


def global_pool(x):
    """Pallas implementation of _GlobalPool.forward (global average pool)."""
    if x.ndim <= 2:
        return x

    lead = x.shape[:2]
    rows = lead[0] * lead[1]
    n_reduce = 1
    for d in x.shape[2:]:
        n_reduce *= d

    # Free reshape for a contiguous NCHW tensor: rows -> sublanes, H*W -> lanes.
    x2 = x.reshape(rows, n_reduce)

    # Sublane tile: multiple of 8; lane tile: multiple of 128. Cap the input
    # tile at 256 x 2048 f32 (~2 MiB) so 2x double-buffering stays small even
    # on v7x (64 MiB physical VMEM).
    tm = _pick_tile(rows, 8, 256)
    tk = _pick_tile(n_reduce, 128, 2048)
    grid = (rows // tm, n_reduce // tk)

    out = pl.pallas_call(
        functools.partial(_global_avg_pool_kernel, inv_n=1.0 / n_reduce),
        out_shape=jax.ShapeDtypeStruct((rows, 1), x.dtype),
        grid=grid,
        in_specs=[pl.BlockSpec((tm, tk), lambda i, k: (i, k))],
        out_specs=pl.BlockSpec((tm, 1), lambda i, k: (i, 0)),
        scratch_shapes=[pltpu.VMEM((tm, 1), jnp.float32)],
        compiler_params=pltpu.CompilerParams(
            dimension_semantics=("parallel", "arbitrary"),
            vmem_limit_bytes=48 * 1024 * 1024,
        ),
    )(x2)
    return out.reshape(lead)


def global_pool_ref(x):
    # pure-JAX reference mirroring the PyTorch while-loop semantics
    out = x
    while out.ndim > 2:
        out = jnp.mean(out, axis=-1)
    return out


if __name__ == "__main__":
    key = jax.random.PRNGKey(0)
    x = jax.random.normal(key, (2, 4, 16, 16), dtype=jnp.float32)

    out = global_pool(x)
    out = jax.block_until_ready(out)

    ref = global_pool_ref(x)
    assert out.shape == (2, 4), out.shape
    assert jnp.allclose(out, ref, atol=1e-5, rtol=1e-5), "mismatch vs reference"

    print("KERNEL_OK")
</pallas_src>

<mosaic_0001>
module attributes {stable_mosaic.version = 11 : i64} {
  func.func @_global_avg_pool_kernel(%arg0: i32, %arg1: i32, %arg2: memref<8x256xf32, #tpu.memory_space<vmem>>, %arg3: memref<8x1xf32, #tpu.memory_space<vmem>>, %arg4: memref<8x1xf32, #tpu.memory_space<vmem>>) attributes {dimension_semantics = [#tpu.dimension_semantics<parallel>, #tpu.dimension_semantics<arbitrary>], iteration_bounds = array<i64: 1, 1>, scalar_prefetch = 0 : i64, scratch_operands = 1 : i64, tpu.core_type = #tpu.core_type<tc>, window_params = [{transform_indices = @transform_0, window_bounds = array<i64: 8, 256>}, {transform_indices = @transform_1, window_bounds = array<i64: 8, 1>}]} {
    %c0_i32 = arith.constant 0 : i32
    %0 = arith.cmpi eq, %arg1, %c0_i32 : i32
    %1 = arith.extui %0 : i1 to i32
    %c0_i32_0 = arith.constant 0 : i32
    %2 = arith.cmpi ne, %1, %c0_i32_0 : i32
    scf.if %2 {
      %cst_8 = arith.constant 0.000000e+00 : f32
      %12 = vector.broadcast %cst_8 : f32 to vector<8x1xf32>
      %c0_9 = arith.constant 0 : index
      %c0_10 = arith.constant 0 : index
      %13 = vector.load %arg4[%c0_9, %c0_10] : memref<8x1xf32, #tpu.memory_space<vmem>>, vector<8x1xf32>
      tpu.vector_store %arg4[%c0_9, %c0_10], %12 {strides = array<i32>} : memref<8x1xf32, #tpu.memory_space<vmem>>, vector<8x1xf32>,
    } else {
    }
    %c0 = arith.constant 0 : index
    %c0_1 = arith.constant 0 : index
    %3 = vector.load %arg4[%c0, %c0_1] : memref<8x1xf32, #tpu.memory_space<vmem>>, vector<8x1xf32>
    %c0_2 = arith.constant 0 : index
    %c0_3 = arith.constant 0 : index
    %4 = vector.load %arg2[%c0_2, %c0_3] : memref<8x256xf32, #tpu.memory_space<vmem>>, vector<8x256xf32>
    %cst = arith.constant dense<0.000000e+00> : vector<8xf32>
    %5 = vector.multi_reduction <add>, %4, %cst [1] : vector<8x256xf32> to vector<8xf32>
    %6 = vector.shape_cast %5 : vector<8xf32> to vector<8x1xf32>
    %7 = arith.addf %3, %6 : vector<8x1xf32>
    %c0_4 = arith.constant 0 : index
    %c0_5 = arith.constant 0 : index
    %8 = vector.load %arg4[%c0_4, %c0_5] : memref<8x1xf32, #tpu.memory_space<vmem>>, vector<8x1xf32>
    tpu.vector_store %arg4[%c0_4, %c0_5], %7 {strides = array<i32>} : memref<8x1xf32, #tpu.memory_space<vmem>>, vector<8x1xf32>,
    %c0_i32_6 = arith.constant 0 : i32
    %9 = arith.cmpi eq, %arg1, %c0_i32_6 : i32
    %10 = arith.extui %9 : i1 to i32
    %c0_i32_7 = arith.constant 0 : i32
    %11 = arith.cmpi ne, %10, %c0_i32_7 : i32
    scf.if %11 {
      %c0_8 = arith.constant 0 : index
      %c0_9 = arith.constant 0 : index
      %12 = vector.load %arg4[%c0_8, %c0_9] : memref<8x1xf32, #tpu.memory_space<vmem>>, vector<8x1xf32>
      %cst_10 = arith.constant 3.906250e-03 : f32
      %13 = vector.broadcast %cst_10 : f32 to vector<8x1xf32>
      %14 = arith.mulf %12, %13 : vector<8x1xf32>
      %c0_11 = arith.constant 0 : index
      %c0_12 = arith.constant 0 : index
      %15 = vector.load %arg3[%c0_11, %c0_12] : memref<8x1xf32, #tpu.memory_space<vmem>>, vector<8x1xf32>
      tpu.vector_store %arg3[%c0_11, %c0_12], %14 {strides = array<i32>} : memref<8x1xf32, #tpu.memory_space<vmem>>, vector<8x1xf32>,
    } else {
    }
    return
  }
  func.func @transform_0(%arg0: i32, %arg1: i32) -> (i32, i32) {
    %c0_i32 = arith.constant 0 : i32
    return %arg0, %arg1 : i32, i32
  }
  func.func @transform_1(%arg0: i32, %arg1: i32) -> (i32, i32) {
    %c0_i32 = arith.constant 0 : i32
    %c0_i32_0 = arith.constant 0 : i32
    return %arg0, %c0_i32 : i32, i32
  }
}

</mosaic_0001>

<llo_original>
// kernel: tpu_custom_call.1
$region0: #{tpu_custom_call.1}
  #allocation0 [shape = 'u32[]', space=smem, size = 0x4, offset = 0x4, fixed_abs, tag = 'smem constant byte address 0x4 - core index']
  #allocation1 [shape = 'u32[144,128]{1,0:T(1,128)}', space=vmem, size = 0x12000, scoped, tag = 'internal scratch']
  #allocation2 [shape = 'f32[8,1]{1,0:T(8,128)}', space=vmem, size = 0x1000, scoped, tag = 'scratch operand']
  %s0 = inlined_call_operand.hbm [shape: f32[8,256], index: 0, kind: input, shape index: {}]
  %s1 = inlined_call_operand.vmem [shape: f32[8,1], index: 1, kind: output, shape index: {}]
  %s2 = sld [smem:[#allocation0]]
  $region26: #{tpu_custom_call.1} parent=0
    _
  %s4 = ssub.s32 1, %s2
  %s5 = scalar_select 0, %s4, %s2
  $region1: #{tpu_custom_call.1} parent=0
    #allocation3 [shape = 'u8[8192]{0}', space=vmem, size = 0x2000, scoped, tag = 'input window, operand 0, single buffered']
    #allocation4 [shape = 's32[1]{0}', space=sflag, size = 0x4, scoped, tag = 'scoped memory for tpu_custom_call.1']
    %6 = vsyncpa [#allocation4], 0
    // Predicated region
    $region2: #{tpu_custom_call.1} parent=1 // pred_check
      _
    $region3: #{tpu_custom_call.1} parent=1 // pred_check_branch
      %8 = sbr.rel (0) target = $region5
    $region4: #{tpu_custom_call.1} parent=1 // pred_region
      %s10 = ssub.s32 256, 256
      %11 = vsyncadd [#allocation4], %s10
      %s13 = sshll.u32 [#allocation3], 4
      %s14 = int_to_ptr.vmem [resolvable:$true] %s13
      %16 = dma.hbm_to_vmem [thread:$0]  %s0, 256, %s14, [#allocation4]
    $region5: #{tpu_custom_call.1} parent=1 // pred_fallthru
      _
    // Predicated region
    $region6: #{tpu_custom_call.1} parent=1 // pred_check
      _
    $region7: #{tpu_custom_call.1} parent=1 // pred_check_branch
      %18 = sbr.rel (0) target = $region9
    $region8: #{tpu_custom_call.1} parent=1 // pred_region
      %19 = dma.done [#allocation4], 256
    $region9: #{tpu_custom_call.1} parent=1 // pred_fallthru
      _
    %p20 = scmp.eq.s32.totalorder 0, 0
    // Predicated region
    $region10: #{tpu_custom_call.1} parent=1 // pred_check
      %p21 = pneg %p20
    $region11: #{tpu_custom_call.1} parent=1 // pred_check_branch
      %23 = sbr.rel (%p21) target = $region13
    $region12: #{tpu_custom_call.1} parent=1 // pred_region
      %vm24 = vcmask 7168
      %25 = vst.msk [vmem:[#allocation2] sm:$0xff] %vm24, 0.0
    $region13: #{tpu_custom_call.1} parent=1 // pred_fallthru
      _
    %v26 = vld [vmem:[#allocation2] sm:$0xff]
    %v27 = vld [vmem:[#allocation3] sm:$0xff]
    %v28 = vld [vmem:[#allocation3 + $0x8] sm:$0xff]
    %v29 = vadd.f32 %v27, %v28
    %30 = vadd.xlane.f32.xlu0 %v29
    %v31 = vpop.xlane.xlu0 %30
    %v32 = vadd.f32 %v26, %v31
    %vm33 = vcmask 7168
    %34 = vst.msk [vmem:[#allocation2] sm:$0xff] %vm33, %v32
    // Predicated region
    $region14: #{tpu_custom_call.1} parent=1 // pred_check
      %p35 = pneg %p20
    $region15: #{tpu_custom_call.1} parent=1 // pred_check_branch
      %37 = sbr.rel (%p35) target = $region17
    $region16: #{tpu_custom_call.1} parent=1 // pred_region
      %v38 = vld [vmem:[#allocation2] sm:$0xff]
      %v39 = vmul.f32 %v38, 0.00390625
      %40 = vst.msk [vmem:[%s1] sm:$0xff] %vm33, %v39
    $region17: #{tpu_custom_call.1} parent=1 // pred_fallthru
      _
    // Predicated region
    $region18: #{tpu_custom_call.1} parent=1 // pred_check
      _
    $region19: #{tpu_custom_call.1} parent=1 // pred_check_branch
      %42 = sbr.rel (0) target = $region21
    $region20: #{tpu_custom_call.1} parent=1 // pred_region
      _
    $region21: #{tpu_custom_call.1} parent=1 // pred_fallthru
      _
    // Predicated region
    $region22: #{tpu_custom_call.1} parent=1 // pred_check
      _
    $region23: #{tpu_custom_call.1} parent=1 // pred_check_branch
      %44 = sbr.rel (0) target = $region25
    $region24: #{tpu_custom_call.1} parent=1 // pred_region
      _
    $region25: #{tpu_custom_call.1} parent=1 // pred_fallthru
      _
    %45 = vsyncpa [#allocation4], 1

</llo_original>
